<compile_context>
chip_gen: v5e
topology: v5e:2x2
jax: 0.10.0
libtpu: 0.0.40
codegen_flags: <defaults>
</compile_context>

<pallas_src>
import jax
import jax.numpy as jnp
from jax import lax
from jax.experimental import pallas as pl
from jax.experimental.pallas import tpu as pltpu

NUM_CLASSES = 7


def f1_kernel(pred_ref, real_ref, o_ref):
    C = NUM_CLASSES
    pred = pred_ref[...]                                   # (1, N) int32
    real = real_ref[...]                                   # (1, N) int32
    N = pred.shape[1]

    # One-hot encodings built with 2-D iota (TPU requires >=2D iota).
    class_ids = lax.broadcasted_iota(jnp.int32, (C, N), 0)           # (C, N)
    oh_pred = (pred == class_ids).astype(jnp.float32)                # (C, N)
    oh_real = (real == class_ids).astype(jnp.float32)                # (C, N)

    # Confusion matrix and its transpose via dot_general contracting on the
    # sample axis (no materialized transpose):
    #   cm[r, p]   = #{i : real[i] == r and pred[i] == p}
    dn = (((1,), (1,)), ((), ()))
    cm = lax.dot_general(oh_real, oh_pred, dn,
                         preferred_element_type=jnp.float32)          # (C, C)
    cm_t = lax.dot_general(oh_pred, oh_real, dn,
                           preferred_element_type=jnp.float32)        # (C, C) == cm.T

    eye = (lax.broadcasted_iota(jnp.int32, (C, C), 0)
           == lax.broadcasted_iota(jnp.int32, (C, C), 1)).astype(jnp.float32)

    diag = jnp.sum(cm * eye, axis=1, keepdims=True)        # (C, 1) true positives
    row_sum = jnp.sum(cm, axis=1, keepdims=True)           # (C, 1) == CM.sum(axis=1)
    col_sum = jnp.sum(cm_t, axis=1, keepdims=True)         # (C, 1) == CM.sum(axis=0)

    # torch.nan_to_num(x/y, nan=0.0): the only NaN case is 0/0, and whenever a
    # denominator below is 0 the numerator is also 0, so dividing by 1 gives
    # exactly the same result (0.0) with no NaN generated.
    def _safe(d):
        return jnp.where(d != 0.0, d, 1.0)

    recall = diag / _safe(row_sum)                         # (C, 1)
    precision = diag / _safe(col_sum)                      # (C, 1)
    f1 = 2.0 * precision * recall / _safe(precision + recall)

    # mean over the 7 classes -> scalar, stored as (1, 1).
    o_ref[...] = (jnp.sum(f1, axis=0, keepdims=True) * (1.0 / C)).astype(o_ref.dtype)


def f1_score(pred, real):
    assert pred.ndim == 1 and pred.shape == real.shape
    n = pred.shape[0]
    pred2 = pred.reshape(1, n).astype(jnp.int32)           # lane-dense (1, N)
    real2 = real.reshape(1, n).astype(jnp.int32)

    out = pl.pallas_call(
        f1_kernel,
        out_shape=jax.ShapeDtypeStruct((1, 1), jnp.float32),
        in_specs=[pl.BlockSpec(memory_space=pltpu.MemorySpace.VMEM),
                  pl.BlockSpec(memory_space=pltpu.MemorySpace.VMEM)],
        out_specs=pl.BlockSpec(memory_space=pltpu.MemorySpace.VMEM),
    )(pred2, real2)
    return out[0, 0]


def f1_score_reference(pred, real, num_classes=NUM_CLASSES):
    # Pure-JAX mirror of the PyTorch forward.
    cm = jnp.zeros((num_classes, num_classes), jnp.float32)
    cm = cm.at[real, pred].add(1.0)
    n = cm.sum(axis=1)
    n2 = cm.sum(axis=0)
    d = jnp.diag(cm)
    recall = jnp.nan_to_num(d / n, nan=0.0)
    precision = jnp.nan_to_num(d / n2, nan=0.0)
    f1 = jnp.nan_to_num(2.0 * precision * recall / (precision + recall), nan=0.0)
    return f1.mean()


if __name__ == "__main__":
    N = 128
    key = jax.random.PRNGKey(0)
    k1, k2 = jax.random.split(key)
    # pred over all 7 classes; real restricted to classes 0..4 so the 0/0 -> 0
    # (nan_to_num) paths for the unused classes are actually exercised.
    pred = jax.random.randint(k1, (N,), 0, NUM_CLASSES, dtype=jnp.int32)
    real = jax.random.randint(k2, (N,), 0, 5, dtype=jnp.int32)

    out = f1_score(pred, real)
    out = jax.block_until_ready(out)

    ref = f1_score_reference(pred, real)
    assert out.shape == ()
    assert jnp.allclose(out, ref, rtol=1e-5, atol=1e-5), (out, ref)

    print("KERNEL_OK")
</pallas_src>

<mosaic_0001>
module attributes {stable_mosaic.version = 11 : i64} {
  func.func @f1_kernel(%arg0: memref<1x128xi32, #tpu.memory_space<vmem>>, %arg1: memref<1x128xi32, #tpu.memory_space<vmem>>, %arg2: memref<1x1xf32, #tpu.memory_space<vmem>>) attributes {dimension_semantics = [], scalar_prefetch = 0 : i64, scratch_operands = 0 : i64, tpu.core_type = #tpu.core_type<tc>} {
    %c0 = arith.constant 0 : index
    %c0_0 = arith.constant 0 : index
    %0 = vector.load %arg0[%c0, %c0_0] : memref<1x128xi32, #tpu.memory_space<vmem>>, vector<1x128xi32>
    %c0_1 = arith.constant 0 : index
    %c0_2 = arith.constant 0 : index
    %1 = vector.load %arg1[%c0_1, %c0_2] : memref<1x128xi32, #tpu.memory_space<vmem>>, vector<1x128xi32>
    %2 = tpu.iota {dimensions = array<i32: 0>} : vector<7x128xi32>
    %3 = vector.broadcast %0 : vector<1x128xi32> to vector<7x128xi32>
    %4 = arith.cmpi eq, %3, %2 : vector<7x128xi32>
    %5 = arith.extui %4 : vector<7x128xi1> to vector<7x128xi32>
    %6 = arith.sitofp %5 : vector<7x128xi32> to vector<7x128xf32>
    %7 = vector.broadcast %1 : vector<1x128xi32> to vector<7x128xi32>
    %8 = arith.cmpi eq, %7, %2 : vector<7x128xi32>
    %9 = arith.extui %8 : vector<7x128xi1> to vector<7x128xi32>
    %10 = arith.sitofp %9 : vector<7x128xi32> to vector<7x128xf32>
    %cst = arith.constant dense<0.000000e+00> : vector<7x7xf32>
    %11 = tpu.matmul %10, %6, %cst {dimension_numbers = #tpu.dot_dimension_numbers<[1], [1], [0], [0], [0, 0, 1, 0], [], []>} : vector<7x128xf32>, vector<7x128xf32>, vector<7x7xf32> -> vector<7x7xf32>
    %cst_3 = arith.constant dense<0.000000e+00> : vector<7x7xf32>
    %12 = tpu.matmul %6, %10, %cst_3 {dimension_numbers = #tpu.dot_dimension_numbers<[1], [1], [0], [0], [0, 0, 1, 0], [], []>} : vector<7x128xf32>, vector<7x128xf32>, vector<7x7xf32> -> vector<7x7xf32>
    %13 = tpu.iota {dimensions = array<i32: 0>} : vector<7x7xi32>
    %14 = tpu.iota {dimensions = array<i32: 1>} : vector<7x7xi32>
    %15 = arith.cmpi eq, %13, %14 : vector<7x7xi32>
    %16 = arith.extui %15 : vector<7x7xi1> to vector<7x7xi32>
    %17 = arith.sitofp %16 : vector<7x7xi32> to vector<7x7xf32>
    %18 = arith.mulf %11, %17 : vector<7x7xf32>
    %cst_4 = arith.constant dense<0.000000e+00> : vector<7xf32>
    %19 = vector.multi_reduction <add>, %18, %cst_4 [1] : vector<7x7xf32> to vector<7xf32>
    %20 = vector.shape_cast %19 : vector<7xf32> to vector<7x1xf32>
    %cst_5 = arith.constant dense<0.000000e+00> : vector<7xf32>
    %21 = vector.multi_reduction <add>, %11, %cst_5 [1] : vector<7x7xf32> to vector<7xf32>
    %22 = vector.shape_cast %21 : vector<7xf32> to vector<7x1xf32>
    %cst_6 = arith.constant dense<0.000000e+00> : vector<7xf32>
    %23 = vector.multi_reduction <add>, %12, %cst_6 [1] : vector<7x7xf32> to vector<7xf32>
    %24 = vector.shape_cast %23 : vector<7xf32> to vector<7x1xf32>
    %cst_7 = arith.constant 0.000000e+00 : f32
    %25 = vector.broadcast %cst_7 : f32 to vector<7x1xf32>
    %26 = arith.cmpf one, %22, %25 : vector<7x1xf32>
    %cst_8 = arith.constant 1.000000e+00 : f32
    %27 = vector.broadcast %cst_8 : f32 to vector<7x1xf32>
    %28 = arith.select %26, %22, %27 : vector<7x1xi1>, vector<7x1xf32>
    %29 = arith.divf %20, %28 : vector<7x1xf32>
    %cst_9 = arith.constant 0.000000e+00 : f32
    %30 = vector.broadcast %cst_9 : f32 to vector<7x1xf32>
    %31 = arith.cmpf one, %24, %30 : vector<7x1xf32>
    %cst_10 = arith.constant 1.000000e+00 : f32
    %32 = vector.broadcast %cst_10 : f32 to vector<7x1xf32>
    %33 = arith.select %31, %24, %32 : vector<7x1xi1>, vector<7x1xf32>
    %34 = arith.divf %20, %33 : vector<7x1xf32>
    %cst_11 = arith.constant 2.000000e+00 : f32
    %35 = vector.broadcast %cst_11 : f32 to vector<7x1xf32>
    %36 = arith.mulf %35, %34 : vector<7x1xf32>
    %37 = arith.mulf %36, %29 : vector<7x1xf32>
    %38 = arith.addf %34, %29 : vector<7x1xf32>
    %cst_12 = arith.constant 0.000000e+00 : f32
    %39 = vector.broadcast %cst_12 : f32 to vector<7x1xf32>
    %40 = arith.cmpf one, %38, %39 : vector<7x1xf32>
    %cst_13 = arith.constant 1.000000e+00 : f32
    %41 = vector.broadcast %cst_13 : f32 to vector<7x1xf32>
    %42 = arith.select %40, %38, %41 : vector<7x1xi1>, vector<7x1xf32>
    %43 = arith.divf %37, %42 : vector<7x1xf32>
    %cst_14 = arith.constant dense<0.000000e+00> : vector<1xf32>
    %44 = vector.multi_reduction <add>, %43, %cst_14 [0] : vector<7x1xf32> to vector<1xf32>
    %45 = vector.shape_cast %44 : vector<1xf32> to vector<1x1xf32>
    %cst_15 = arith.constant 0.142857149 : f32
    %46 = vector.broadcast %cst_15 : f32 to vector<1x1xf32>
    %47 = arith.mulf %45, %46 : vector<1x1xf32>
    %c0_16 = arith.constant 0 : index
    %c0_17 = arith.constant 0 : index
    %48 = vector.load %arg2[%c0_16, %c0_17] : memref<1x1xf32, #tpu.memory_space<vmem>>, vector<1x1xf32>
    tpu.vector_store %arg2[%c0_16, %c0_17], %47 {strides = array<i32>} : memref<1x1xf32, #tpu.memory_space<vmem>>, vector<1x1xf32>,
    return
  }
}

</mosaic_0001>

<llo_original>
// kernel: tpu_custom_call.1
$region0: #{tpu_custom_call.1}
  #allocation0 [shape = 'u32[]', space=smem, size = 0x4, offset = 0x4, fixed_abs, tag = 'smem constant byte address 0x4 - core index']
  #allocation1 [shape = 'u32[72,128]{1,0:T(1,128)}', space=vmem, size = 0x9000, scoped, tag = 'internal scratch']
  %s0 = inlined_call_operand.hbm [shape: s32[1,128], index: 0, kind: input, shape index: {}]
  %s1 = inlined_call_operand.hbm [shape: s32[1,128], index: 1, kind: input, shape index: {}]
  %s2 = inlined_call_operand.hbm [shape: f32[1,1], index: 2, kind: output, shape index: {}]
  %s3 = sld [smem:[#allocation0]]
  $region26: #{tpu_custom_call.1} parent=0
    _
  %s5 = ssub.s32 1, %s3
  %s6 = scalar_select 0, %s5, %s3
  $region1: #{tpu_custom_call.1} parent=0
    #allocation2 [shape = 'u8[512]{0}', space=vmem, size = 0x400, scoped, tag = 'input window, operand 0, single buffered']
    #allocation3 [shape = 's32[1]{0}', space=sflag, size = 0x4, scoped, tag = 'scoped memory for tpu_custom_call.1']
    #allocation4 [shape = 's32[1]{0}', space=sflag, size = 0x4, scoped, tag = 'scoped memory for tpu_custom_call.1']
    #allocation5 [shape = 'u8[512]{0}', space=vmem, size = 0x400, scoped, tag = 'input window, operand 1, single buffered']
    #allocation6 [shape = 's32[1]{0}', space=sflag, size = 0x4, scoped, tag = 'scoped memory for tpu_custom_call.1']
    #allocation7 [shape = 'u8[512]{0}', space=vmem, size = 0x400, scoped, tag = 'output window, operand 0, single buffered']
    %7 = vsyncpa [#allocation3], 0
    %8 = vsyncpa [#allocation6], 0
    %9 = vsyncpa [#allocation4], 0
    // Predicated region
    $region2: #{tpu_custom_call.1} parent=1 // pred_check
      _
    $region3: #{tpu_custom_call.1} parent=1 // pred_check_branch
      %11 = sbr.rel (0) target = $region5
    $region4: #{tpu_custom_call.1} parent=1 // pred_region
      %13 = vsyncadd [#allocation3], 0
      %s15 = sshll.u32 %s0, 4
      %s16 = int_to_ptr.hbm [resolvable:$true] %s15
      %s17 = sshll.u32 [#allocation2], 4
      %s18 = int_to_ptr.vmem [resolvable:$true] %s17
      %20 = dma.hbm_to_vmem [thread:$0]  %s16, 16, %s18, [#allocation3]
    $region5: #{tpu_custom_call.1} parent=1 // pred_fallthru
      _
    // Predicated region
    $region6: #{tpu_custom_call.1} parent=1 // pred_check
      _
    $region7: #{tpu_custom_call.1} parent=1 // pred_check_branch
      %22 = sbr.rel (0) target = $region9
    $region8: #{tpu_custom_call.1} parent=1 // pred_region
      %24 = vsyncadd [#allocation6], 0
      %s26 = sshll.u32 %s1, 4
      %s27 = int_to_ptr.hbm [resolvable:$true] %s26
      %s28 = sshll.u32 [#allocation5], 4
      %s29 = int_to_ptr.vmem [resolvable:$true] %s28
      %31 = dma.hbm_to_vmem [thread:$0]  %s27, 16, %s29, [#allocation6]
    $region9: #{tpu_custom_call.1} parent=1 // pred_fallthru
      _
    // Predicated region
    $region10: #{tpu_custom_call.1} parent=1 // pred_check
      _
    $region11: #{tpu_custom_call.1} parent=1 // pred_check_branch
      %33 = sbr.rel (0) target = $region13
    $region12: #{tpu_custom_call.1} parent=1 // pred_region
      %35 = dma.done [#allocation3], 16
    $region13: #{tpu_custom_call.1} parent=1 // pred_fallthru
      _
    // Predicated region
    $region14: #{tpu_custom_call.1} parent=1 // pred_check
      _
    $region15: #{tpu_custom_call.1} parent=1 // pred_check_branch
      %37 = sbr.rel (0) target = $region17
    $region16: #{tpu_custom_call.1} parent=1 // pred_region
      %39 = dma.done [#allocation6], 16
    $region17: #{tpu_custom_call.1} parent=1 // pred_fallthru
      _
    %v40 = vld [vmem:[#allocation2] sm:$0x1]
    %v41 = vld [vmem:[#allocation5] sm:$0x1]
    %v42 = vlaneseq
    %v43 = vshrl.u32 %v42, 7
    %v44 = vperm.slane %v40, 0
    %vm45 = vcmp.eq.s32.totalorder %v44, %v43
    %v46 = vsel %vm45, 1, 0
    %v47 = vcvt.s32.f32 %v46
    %v48 = vperm.slane %v41, 0
    %vm49 = vcmp.eq.s32.totalorder %v48, %v43
    %v50 = vsel %vm49, 1, 0
    %v51 = vcvt.s32.f32 %v50
    %52 = vmatpush.xpose.msra.mxu0 0.0
    %53 = vmatpush.xpose.msra.mxu0 0.0
    %54 = vmatpush.xpose.msra.mxu0 0.0
    %55 = vmatpush.xpose.msra.mxu0 0.0
    %56 = vmatpush.xpose.msra.mxu0 0.0
    %57 = vmatpush.xpose.msra.mxu0 0.0
    %58 = vmatpush.xpose.msra.mxu0 0.0
    %59 = vmatpush.xpose.msra.mxu0 0.0
    %60 = vmatpush.xpose.msra.mxu0 0.0
    %61 = vmatpush.xpose.msra.mxu0 0.0
    %62 = vmatpush.xpose.msra.mxu0 0.0
    %63 = vmatpush.xpose.msra.mxu0 0.0
    %64 = vmatpush.xpose.msra.mxu0 0.0
    %65 = vmatpush.xpose.msra.mxu0 0.0
    %66 = vmatpush.xpose.msra.mxu0 0.0
    %67 = vmatpush.xpose.msra.mxu0 %v47
    %68 = vmatmul.f32.gmra.mxu0 %v51
    %v69 = vpop.f32.mrf.mxu0
    %v70 = vadd.f32 0.0, %v69
    %71 = vdwg.mxu0
    %72 = vmatpush.xpose.msra.mxu0 0.0
    %73 = vmatpush.xpose.msra.mxu0 0.0
    %74 = vmatpush.xpose.msra.mxu0 0.0
    %75 = vmatpush.xpose.msra.mxu0 0.0
    %76 = vmatpush.xpose.msra.mxu0 0.0
    %77 = vmatpush.xpose.msra.mxu0 0.0
    %78 = vmatpush.xpose.msra.mxu0 0.0
    %79 = vmatpush.xpose.msra.mxu0 0.0
    %80 = vmatpush.xpose.msra.mxu0 0.0
    %81 = vmatpush.xpose.msra.mxu0 0.0
    %82 = vmatpush.xpose.msra.mxu0 0.0
    %83 = vmatpush.xpose.msra.mxu0 0.0
    %84 = vmatpush.xpose.msra.mxu0 0.0
    %85 = vmatpush.xpose.msra.mxu0 0.0
    %86 = vmatpush.xpose.msra.mxu0 0.0
    %87 = vmatpush.xpose.msra.mxu0 %v51
    %88 = vmatmul.f32.gmra.mxu0 %v47
    %v89 = vpop.f32.mrf.mxu0
    %v90 = vadd.f32 0.0, %v89
    %91 = vdwg.mxu0
    %v92 = vlaneseq
    %v93 = vand.u32 %v92, 127
    %vm94 = vcmp.eq.s32.totalorder %v43, %v93
    %v95 = vsel %vm94, 1, 0
    %v96 = vcvt.s32.f32 %v95
    %v97 = vmul.f32 %v70, %v96
    %vm98 = vcmask 55296
    %v99 = vsel %vm98, %v97, 0.0
    %100 = vadd.xlane.f32.xlu0 %v99
    %v101 = vpop.xlane.xlu0 %100
    %v102 = vsel %vm98, %v70, 0.0
    %103 = vadd.xlane.f32.xlu0 %v102
    %v104 = vpop.xlane.xlu0 %103
    %v105 = vsel %vm98, %v90, 0.0
    %106 = vadd.xlane.f32.xlu0 %v105
    %v107 = vpop.xlane.xlu0 %106
    %vm108 = vcmp.ne.f32.partialorder %v104, 0.0
    %v109 = vsel %vm108, %v104, 1.0
    %v110 = vrcp.pop %v109
    %v111 = vmul.f32 %v109, %v110
    %v112 = vsub.f32 1.0, %v111
    %v113 = vmul.f32 %v110, %v112
    %v114 = vadd.f32 %v110, %v113
    %vm115 = vweird.f32 %v109
    %vm116 = vweird.f32 %v110
    %vm117 = vmor %vm115, %vm116
    %v118 = vsel %vm117, %v110, %v114
    %v119 = vand.u32 2147483647, %v109
    %vm120 = vcmp.eq.f32.partialorder %v119, 8.507059e+37
    %v121 = vand.u32 %v109, 2147483648
    %v122 = vor.u32 1.1754944e-38, %v121
    %v123 = vsel %vm120, %v122, %v118
    %v124 = vmul.f32 %v101, %v123
    %vm125 = vcmp.ne.f32.partialorder %v107, 0.0
    %v126 = vsel %vm125, %v107, 1.0
    %v127 = vrcp.pop %v126
    %v128 = vmul.f32 %v126, %v127
    %v129 = vsub.f32 1.0, %v128
    %v130 = vmul.f32 %v127, %v129
    %v131 = vadd.f32 %v127, %v130
    %vm132 = vweird.f32 %v126
    %vm133 = vweird.f32 %v127
    %vm134 = vmor %vm132, %vm133
    %v135 = vsel %vm134, %v127, %v131
    %v136 = vand.u32 2147483647, %v126
    %vm137 = vcmp.eq.f32.partialorder %v136, 8.507059e+37
    %v138 = vand.u32 %v126, 2147483648
    %v139 = vor.u32 1.1754944e-38, %v138
    %v140 = vsel %vm137, %v139, %v135
    %v141 = vmul.f32 %v101, %v140
    %v142 = vmul.f32 %v141, 2.0
    %v143 = vmul.f32 %v142, %v124
    %v144 = vadd.f32 %v141, %v124
    %vm145 = vcmp.ne.f32.partialorder %v144, 0.0
    %v146 = vsel %vm145, %v144, 1.0
    %v147 = vrcp.pop %v146
    %v148 = vmul.f32 %v146, %v147
    %v149 = vsub.f32 1.0, %v148
    %v150 = vmul.f32 %v147, %v149
    %v151 = vadd.f32 %v147, %v150
    %vm152 = vweird.f32 %v146
    %vm153 = vweird.f32 %v147
    %vm154 = vmor %vm152, %vm153
    %v155 = vsel %vm154, %v147, %v151
    %v156 = vand.u32 2147483647, %v146
    %vm157 = vcmp.eq.f32.partialorder %v156, 8.507059e+37
    %v158 = vand.u32 %v146, 2147483648
    %v159 = vor.u32 1.1754944e-38, %v158
    %v160 = vsel %vm157, %v159, %v155
    %v161 = vmul.f32 %v143, %v160
    %vm162 = vcmask 1046528
    %v163 = vsel %vm162, %v161, 0.0
    %v164 = vrot.slane %v163, 4
    %v165 = vadd.f32 %v163, %v164
    %v166 = vrot.slane %v165, 2
    %v167 = vadd.f32 %v165, %v166
    %v168 = vrot.slane %v167, 1
    %v169 = vadd.f32 %v167, %v168
    %v170 = vmul.f32 %v169, 0.14285715
    %vm171 = vcmask 0
    %172 = vst.msk [vmem:[#allocation7] sm:$0x1] %vm171, %v170
    // Predicated region
    $region18: #{tpu_custom_call.1} parent=1 // pred_check
      _
    $region19: #{tpu_custom_call.1} parent=1 // pred_check_branch
      %174 = sbr.rel (0) target = $region21
    $region20: #{tpu_custom_call.1} parent=1 // pred_region
      %176 = vsyncadd [#allocation4], 0
      %s178 = sshll.u32 [#allocation7], 4
      %s179 = int_to_ptr.vmem [resolvable:$true] %s178
      %s180 = sshll.u32 %s2, 4
      %s181 = int_to_ptr.hbm [resolvable:$true] %s180
      %183 = dma.vmem_to_hbm [thread:$0]  %s179, 16, %s181, [#allocation4]
    $region21: #{tpu_custom_call.1} parent=1 // pred_fallthru
      _
    // Predicated region
    $region22: #{tpu_custom_call.1} parent=1 // pred_check
      _
    $region23: #{tpu_custom_call.1} parent=1 // pred_check_branch
      %185 = sbr.rel (0) target = $region25
    $region24: #{tpu_custom_call.1} parent=1 // pred_region
      %187 = dma.done [#allocation4], 16
    $region25: #{tpu_custom_call.1} parent=1 // pred_fallthru
      _
    %188 = vsyncpa [#allocation3], 1
    %189 = vsyncpa [#allocation6], 1
    %190 = vsyncpa [#allocation4], 1

</llo_original>
